<compile_context>
chip_gen: v6e
topology: v6e:2x2x1
jax: 0.10.0
libtpu: 0.0.40
codegen_flags: <defaults>
</compile_context>

<pallas_src>
import jax
import jax.numpy as jnp
from jax.experimental import pallas as pl
from jax.experimental.pallas import tpu as pltpu

# ----------------------------- configuration -----------------------------
SEQ_LEN = 32          # configs.seq_len
PRED_LEN = 16         # configs.pred_len
ENC_IN = 4            # configs.enc_in
NFFT = 16             # configs.nfft
HOP = 8               # configs.stft_hop_length
N_LOW = max(NFFT // 8, 1)   # n_low_freqs
INDIVIDUAL = True     # configs.individual (per-channel Linear heads)
BATCH = 2


# --------------------- FreqDecomp (STFT decomposition) --------------------
def freq_decomp(x, nfft=NFFT, hop=HOP, n_low=N_LOW):
    """x: (B, L, C) float32 -> (x_l, x_h, x_trend), each (B, L, C).

    Trend  = iSTFT of frequency bin 0 only.
    Low    = iSTFT of bins [1, n_low).
    High   = iSTFT of bins [n_low, nfft//2 + 1).
    (split_trend=True; masks partition the spectrum so x_l+x_h+x_trend ~= x.)
    """
    B, L, C = x.shape
    xt = jnp.transpose(x, (0, 2, 1)).reshape(B * C, L)
    pad = nfft // 2
    xp = jnp.pad(xt, ((0, 0), (pad, pad)), mode="reflect")      # center=True
    Lp = xp.shape[1]
    n_frames = 1 + (Lp - nfft) // hop

    k = jnp.arange(nfft)
    win = 0.5 * (1.0 - jnp.cos(2.0 * jnp.pi * k / nfft))         # periodic Hann
    idx = jnp.arange(n_frames)[:, None] * hop + k[None, :]       # (F, nfft)

    frames = xp[:, idx] * win[None, None, :]                     # (BC, F, nfft)
    spec = jnp.fft.rfft(frames, axis=-1)                         # (BC, F, nbins)

    nbins = nfft // 2 + 1
    bins = jnp.arange(nbins)
    m_trend = (bins == 0).astype(jnp.float32)
    m_low = ((bins >= 1) & (bins < n_low)).astype(jnp.float32)
    m_high = (bins >= n_low).astype(jnp.float32)

    wsq = jnp.zeros((Lp,), jnp.float32).at[idx.reshape(-1)].add(
        jnp.tile(win * win, n_frames))

    def istft(masked_spec):
        fr = jnp.fft.irfft(masked_spec, n=nfft, axis=-1) * win[None, None, :]
        out = jnp.zeros((B * C, Lp), jnp.float32).at[:, idx.reshape(-1)].add(
            fr.reshape(B * C, -1))
        out = out / jnp.where(wsq > 1e-8, wsq, 1.0)
        out = out[:, pad:pad + L]
        return jnp.transpose(out.reshape(B, C, L), (0, 2, 1))    # (B, L, C)

    x_trend = istft(spec * m_trend[None, None, :])
    x_l = istft(spec * m_low[None, None, :])
    x_h = istft(spec * m_high[None, None, :])
    return x_l, x_h, x_trend


# ------------------------------ Pallas kernel -----------------------------
def fdlinear_head_kernel(lhs_ref, w_ref, b_ref, o_ref):
    """Whole `individual=True` head in one MXU dot.

    lhs : (B, C*3L)    per channel [x_l | x_h | x_trend] along K
    w   : (C*3L, C*P)  block-diagonal [Wf^T ; Wf^T ; Wt^T] per channel
    b   : (1, C*P)     2*bf + bt (folded host-side)
    out : (B, C*P)     lane-dense store
    """
    acc = jnp.dot(lhs_ref[...], w_ref[...], preferred_element_type=jnp.float32)
    o_ref[...] = (acc + b_ref[...]).astype(o_ref.dtype)


def fdlinear_forward(x, params):
    """x: (B, seq_len, C) -> (B, pred_len, C).  params use torch layouts:
    Wf/Wt: (C, pred_len, seq_len), bf/bt: (C, pred_len)."""
    Wf, bf, Wt, bt = params
    B, L, C = x.shape
    P = Wf.shape[1]

    x_l, x_h, x_trend = freq_decomp(x)

    # ---------- host-side layout prep (tiny; static-weight part could be
    # precomputed once at init) ----------
    # LHS: per channel, concatenate the three series along the contraction dim.
    lhs = jnp.stack(
        [jnp.transpose(x_l, (0, 2, 1)),       # (B, C, L)
         jnp.transpose(x_h, (0, 2, 1)),
         jnp.transpose(x_trend, (0, 2, 1))],
        axis=2,
    ).reshape(B, C * 3 * L)                    # (B, C*3L)

    # Block-diagonal weight: rows c*3L..(c+1)*3L are [Wf[c]^T; Wf[c]^T; Wt[c]^T],
    # columns c*P..(c+1)*P are channel c's pred_len outputs.
    WfT = jnp.transpose(Wf, (0, 2, 1))         # (C, L, P)
    WtT = jnp.transpose(Wt, (0, 2, 1))         # (C, L, P)
    W3 = jnp.concatenate([WfT, WfT, WtT], axis=1)            # (C, 3L, P)
    eye_c = jnp.eye(C, dtype=W3.dtype)
    W_big = (W3[:, :, None, :] * eye_c[:, None, :, None]).reshape(
        C * 3 * L, C * P)                                     # (C*3L, C*P)

    bias = (2.0 * bf + bt).reshape(1, C * P)                  # (1, C*P)

    out_flat = pl.pallas_call(
        fdlinear_head_kernel,
        out_shape=jax.ShapeDtypeStruct((B, C * P), jnp.float32),
        in_specs=[
            pl.BlockSpec(memory_space=pltpu.MemorySpace.VMEM),   # lhs
            pl.BlockSpec(memory_space=pltpu.MemorySpace.VMEM),   # W_big
            pl.BlockSpec(memory_space=pltpu.MemorySpace.VMEM),   # bias
        ],
        out_specs=pl.BlockSpec(memory_space=pltpu.MemorySpace.VMEM),
    )(lhs, W_big, bias)

    # (B, C*P) -> (B, pred_len, C)
    return jnp.transpose(out_flat.reshape(B, C, P), (0, 2, 1))


# ------------------------------- reference --------------------------------
def ref_forward(x, params):
    """Unfused per-channel reference (mirrors the PyTorch `individual` loop)."""
    Wf, bf, Wt, bt = params
    x_l, x_h, x_trend = freq_decomp(x)

    def lin(xs, W, b):   # xs: (B,L,C), W: (C,P,L), b: (C,P) -> (B,P,C)
        return jnp.einsum("blc,cpl->bpc", xs, W) + jnp.transpose(b)[None]

    return lin(x_l, Wf, bf) + lin(x_h, Wf, bf) + lin(x_trend, Wt, bt)


# --------------------------------- main ------------------------------------
if __name__ == "__main__":
    key = jax.random.PRNGKey(0)
    kx, kwf, kbf, kwt, kbt = jax.random.split(key, 5)

    x = jax.random.normal(kx, (BATCH, SEQ_LEN, ENC_IN), dtype=jnp.float32)

    # deterministic nn.Linear-style init (uniform(-1/sqrt(in), 1/sqrt(in)))
    bound = 1.0 / (SEQ_LEN ** 0.5)
    Wf = jax.random.uniform(kwf, (ENC_IN, PRED_LEN, SEQ_LEN),
                            minval=-bound, maxval=bound, dtype=jnp.float32)
    bf = jax.random.uniform(kbf, (ENC_IN, PRED_LEN),
                            minval=-bound, maxval=bound, dtype=jnp.float32)
    Wt = jax.random.uniform(kwt, (ENC_IN, PRED_LEN, SEQ_LEN),
                            minval=-bound, maxval=bound, dtype=jnp.float32)
    bt = jax.random.uniform(kbt, (ENC_IN, PRED_LEN),
                            minval=-bound, maxval=bound, dtype=jnp.float32)
    params = (Wf, bf, Wt, bt)

    out = jax.jit(fdlinear_forward)(x, params)
    out = jax.block_until_ready(out)

    assert out.shape == (BATCH, PRED_LEN, ENC_IN), out.shape
    ref = jax.block_until_ready(ref_forward(x, params))
    assert jnp.allclose(out, ref, rtol=1e-4, atol=2e-5), (
        float(jnp.max(jnp.abs(out - ref))))

    print("KERNEL_OK")
</pallas_src>

<mosaic_0001>
module attributes {stable_mosaic.version = 11 : i64} {
  func.func private @main(%arg0: i32) attributes {dimension_semantics = [#tpu.dimension_semantics<core_parallel>], iteration_bounds = array<i64: 2>, tpu.core_type = #tpu.core_type<sc_scalar_subcore>, window_params = []} {
    return
  }
}

module attributes {stable_mosaic.version = 11 : i64} {
  func.func private @main(%arg0: i32) attributes {dimension_semantics = [#tpu.dimension_semantics<core_parallel>], iteration_bounds = array<i64: 2>, tpu.core_type = #tpu.core_type<sc_scalar_subcore>, window_params = []} {
    return
  }
}

module attributes {stable_mosaic.version = 11 : i64} {
  func.func @fdlinear_head_kernel(%arg0: memref<2x384xf32, #tpu.memory_space<vmem>>, %arg1: memref<384x64xf32, #tpu.memory_space<vmem>>, %arg2: memref<1x64xf32, #tpu.memory_space<vmem>>, %arg3: memref<2x64xf32, #tpu.memory_space<vmem>>) attributes {dimension_semantics = [], scalar_prefetch = 0 : i64, scratch_operands = 0 : i64, tpu.core_type = #tpu.core_type<tc>} {
    %c0 = arith.constant 0 : index
    %c0_0 = arith.constant 0 : index
    %0 = vector.load %arg0[%c0, %c0_0] : memref<2x384xf32, #tpu.memory_space<vmem>>, vector<2x384xf32>
    %c0_1 = arith.constant 0 : index
    %c0_2 = arith.constant 0 : index
    %1 = vector.load %arg1[%c0_1, %c0_2] : memref<384x64xf32, #tpu.memory_space<vmem>>, vector<384x64xf32>
    %cst = arith.constant dense<0.000000e+00> : vector<2x64xf32>
    %2 = tpu.matmul %0, %1, %cst {dimension_numbers = #tpu.dot_dimension_numbers<[1], [0], [0], [1], [0, 0, 1, 1], [], []>} : vector<2x384xf32>, vector<384x64xf32>, vector<2x64xf32> -> vector<2x64xf32>
    %c0_3 = arith.constant 0 : index
    %c0_4 = arith.constant 0 : index
    %3 = vector.load %arg2[%c0_3, %c0_4] : memref<1x64xf32, #tpu.memory_space<vmem>>, vector<1x64xf32>
    %4 = vector.broadcast %3 : vector<1x64xf32> to vector<2x64xf32>
    %5 = arith.addf %2, %4 : vector<2x64xf32>
    %c0_5 = arith.constant 0 : index
    %c0_6 = arith.constant 0 : index
    %6 = vector.load %arg3[%c0_5, %c0_6] : memref<2x64xf32, #tpu.memory_space<vmem>>, vector<2x64xf32>
    tpu.vector_store %arg3[%c0_5, %c0_6], %5 {strides = array<i32>} : memref<2x64xf32, #tpu.memory_space<vmem>>, vector<2x64xf32>,
    return
  }
}

</mosaic_0001>

<llo_original>
// kernel: reverse.11
$region0: #{reverse.11}
  %s0 = inlined_call_operand.vmem [shape: f32[8,5,7], index: 0, kind: input, shape index: {}]
  %s1 = inlined_call_operand.vmem [shape: f32[8,5,7], index: 1, kind: output, shape index: {}]
  %v2 = vlaneseq
  %v3 = vsub.s32 6, %v2
  %4 = vset.pattern.permute.xlu0 %v3
  $region1: #{reverse.11} parent=0
    #allocation0 [shape = 'u8[20480]{0}', space=vmem, size = 0x5000, scoped, tag = 'operand span for operand 0']
    #allocation1 [shape = 'u8[20480]{0}', space=vmem, size = 0x5000, scoped, tag = 'operand span for operand 1']
    // Predicated region
    $region2: #{reverse.11} parent=1 // pred_check
      _
    $region3: #{reverse.11} parent=1 // pred_check_branch
      %6 = sbr.rel (0) target = $region5
    $region4: #{reverse.11} parent=1 // pred_region
      // Predicated region
      $region6: #{reverse.11} parent=4 // pred_check
        _
      $region7: #{reverse.11} parent=4 // pred_check_branch
        %8 = sbr.rel (0) target = $region9
      $region8: #{reverse.11} parent=4 // pred_region
        // Predicated region
        $region21: #{reverse.11} parent=8 // pred_check
          _
        $region22: #{reverse.11} parent=8 // pred_check_branch
          %32 = sbr.rel (0) target = $region24
        $region23: #{reverse.11} parent=8 // pred_region
          loop: start=0, step=1, limit=1
          $region25: #{reverse.11} parent=23 // loop_pre_header
            _
          $region26: #{reverse.11} parent=23 // loop_header
            %s34 = sphi 0, %s38
            %p35 = scmp.ge.s32.totalorder %s34, 1
            %s39 = sphi %s0, %s0
            %s40 = sphi [#allocation0], [#allocation0]
          $region27: #{reverse.11} parent=23 // loop_header_branch
            %37 = sbr.rel (%p35) target = $region31
          $region28: #{reverse.11} parent=23 // loop_body
            %v41 = vld [vmem:[%s39] sm:$0xff]
            %42 = vst [vmem:[%s40] sm:$0xff] %v41
            %v43 = vld [vmem:[%s39 + $0x8] sm:$0xff]
            %44 = vst [vmem:[%s40 + $0x8] sm:$0xff] %v43
            %v45 = vld [vmem:[%s39 + $0x10] sm:$0xff]
            %46 = vst [vmem:[%s40 + $0x10] sm:$0xff] %v45
            %v47 = vld [vmem:[%s39 + $0x18] sm:$0xff]
            %48 = vst [vmem:[%s40 + $0x18] sm:$0xff] %v47
            %v49 = vld [vmem:[%s39 + $0x20] sm:$0xff]
            %50 = vst [vmem:[%s40 + $0x20] sm:$0xff] %v49
          $region29: #{reverse.11} parent=23 // loop_footer
            %s38 = sadd.s32 1, %s34
          $region30: #{reverse.11} parent=23 // loop_footer_branch
            %33 = sbr.rel target = $region26
          $region31: #{reverse.11} parent=23 // loop_exit
            _
        $region24: #{reverse.11} parent=8 // pred_fallthru
          _
        // Predicated region
        $region32: #{reverse.11} parent=8 // pred_check
          _
        $region33: #{reverse.11} parent=8 // pred_check_branch
          %52 = sbr.rel target = $region35
        $region34: #{reverse.11} parent=8 // pred_region
          _
        $region35: #{reverse.11} parent=8 // pred_fallthru
          _
      $region9: #{reverse.11} parent=4 // pred_fallthru
        _
      // Predicated region
      $region10: #{reverse.11} parent=4 // pred_check
        _
      $region11: #{reverse.11} parent=4 // pred_check_branch
        %10 = sbr.rel target = $region13
      $region12: #{reverse.11} parent=4 // pred_region
        %s12 = ssub.s32 256, 1
        loop: start=0, step=1, limit=1
        $region14: #{reverse.11} parent=12 // loop_pre_header
          _
        $region15: #{reverse.11} parent=12 // loop_header
          %s14 = sphi 0, %s18
          %p15 = scmp.ge.s32.totalorder %s14, 1
          %s19 = sphi %s0, %s0
          %s20 = sphi [#allocation0], [#allocation0]
        $region16: #{reverse.11} parent=12 // loop_header_branch
          %17 = sbr.rel (%p15) target = $region20
        $region17: #{reverse.11} parent=12 // loop_body
          %v21 = vld [vmem:[%s19] sm:%s12]
          %22 = vst [vmem:[%s20] sm:%s12] %v21
          %v23 = vld [vmem:[%s19 + $0x8] sm:%s12]
          %24 = vst [vmem:[%s20 + $0x8] sm:%s12] %v23
          %v25 = vld [vmem:[%s19 + $0x10] sm:%s12]
          %26 = vst [vmem:[%s20 + $0x10] sm:%s12] %v25
          %v27 = vld [vmem:[%s19 + $0x18] sm:%s12]
          %28 = vst [vmem:[%s20 + $0x18] sm:%s12] %v27
          %v29 = vld [vmem:[%s19 + $0x20] sm:%s12]
          %30 = vst [vmem:[%s20 + $0x20] sm:%s12] %v29
        $region18: #{reverse.11} parent=12 // loop_footer
          %s18 = sadd.s32 1, %s14
        $region19: #{reverse.11} parent=12 // loop_footer_branch
          %13 = sbr.rel target = $region15
        $region20: #{reverse.11} parent=12 // loop_exit
          _
      $region13: #{reverse.11} parent=4 // pred_fallthru
        _
    $region5: #{reverse.11} parent=1 // pred_fallthru
      _
    %53 = vnop
    %v54 = vld [vmem:[#allocation0] sm:$0xff]
    %55 = vperm.xlu0 %4, %v54
    %v56 = vpop.permute.xlu0 %55
    %57 = vst [vmem:[#allocation1] sm:$0xff] %v56
    %s58 = scalar_lea.vmem [#allocation1], 8
    %s59 = scalar_lea.vmem [#allocation0], 8
    %v60 = vld [vmem:[%s59] sm:$0xff]
    %61 = vperm.xlu0 %4, %v60
    %v62 = vpop.permute.xlu0 %61
    %63 = vst [vmem:[%s58] sm:$0xff] %v62
    %s64 = scalar_lea.vmem [#allocation1], 16
    %s65 = scalar_lea.vmem [#allocation0], 16
    %v66 = vld [vmem:[%s65] sm:$0xff]
    %67 = vperm.xlu0 %4, %v66
    %v68 = vpop.permute.xlu0 %67
    %69 = vst [vmem:[%s64] sm:$0xff] %v68
    %s70 = scalar_lea.vmem [#allocation1], 24
    %s71 = scalar_lea.vmem [#allocation0], 24
    %v72 = vld [vmem:[%s71] sm:$0xff]
    %73 = vperm.xlu0 %4, %v72
    %v74 = vpop.permute.xlu0 %73
    %75 = vst [vmem:[%s70] sm:$0xff] %v74
    %s76 = scalar_lea.vmem [#allocation1], 32
    %s77 = scalar_lea.vmem [#allocation0], 32
    %v78 = vld [vmem:[%s77] sm:$0xff]
    %79 = vperm.xlu0 %4, %v78
    %v80 = vpop.permute.xlu0 %79
    %81 = vst [vmem:[%s76] sm:$0xff] %v80
    // Predicated region
    $region36: #{reverse.11} parent=1 // pred_check
      _
    $region37: #{reverse.11} parent=1 // pred_check_branch
      %83 = sbr.rel (0) target = $region39
    $region38: #{reverse.11} parent=1 // pred_region
      // Predicated region
      $region40: #{reverse.11} parent=38 // pred_check
        _
      $region41: #{reverse.11} parent=38 // pred_check_branch
        %85 = sbr.rel (0) target = $region43
      $region42: #{reverse.11} parent=38 // pred_region
        // Predicated region
        $region55: #{reverse.11} parent=42 // pred_check
          _
        $region56: #{reverse.11} parent=42 // pred_check_branch
          %109 = sbr.rel (0) target = $region58
        $region57: #{reverse.11} parent=42 // pred_region
          loop: start=0, step=1, limit=1
          $region59: #{reverse.11} parent=57 // loop_pre_header
            _
          $region60: #{reverse.11} parent=57 // loop_header
            %s111 = sphi 0, %s115
            %p112 = scmp.ge.s32.totalorder %s111, 1
            %s116 = sphi [#allocation1], [#allocation1]
            %s117 = sphi %s1, %s1
          $region61: #{reverse.11} parent=57 // loop_header_branch
            %114 = sbr.rel (%p112) target = $region65
          $region62: #{reverse.11} parent=57 // loop_body
            %v118 = vld [vmem:[%s116] sm:$0xff]
            %119 = vst [vmem:[%s117] sm:$0xff] %v118
            %v120 = vld [vmem:[%s116 + $0x8] sm:$0xff]
            %121 = vst [vmem:[%s117 + $0x8] sm:$0xff] %v120
            %v122 = vld [vmem:[%s116 + $0x10] sm:$0xff]
            %123 = vst [vmem:[%s117 + $0x10] sm:$0xff] %v122
            %v124 = vld [vmem:[%s116 + $0x18] sm:$0xff]
            %125 = vst [vmem:[%s117 + $0x18] sm:$0xff] %v124
            %v126 = vld [vmem:[%s116 + $0x20] sm:$0xff]
            %127 = vst [vmem:[%s117 + $0x20] sm:$0xff] %v126
          $region63: #{reverse.11} parent=57 // loop_footer
            %s115 = sadd.s32 1, %s111
          $region64: #{reverse.11} parent=57 // loop_footer_branch
            %110 = sbr.rel target = $region60
          $region65: #{reverse.11} parent=57 // loop_exit
            _
        $region58: #{reverse.11} parent=42 // pred_fallthru
          _
        // Predicated region
        $region66: #{reverse.11} parent=42 // pred_check
          _
        $region67: #{reverse.11} parent=42 // pred_check_branch
          %129 = sbr.rel target = $region69
        $region68: #{reverse.11} parent=42 // pred_region
          _
        $region69: #{reverse.11} parent=42 // pred_fallthru
          _
      $region43: #{reverse.11} parent=38 // pred_fallthru
        _
      // Predicated region
      $region44: #{reverse.11} parent=38 // pred_check
        _
      $region45: #{reverse.11} parent=38 // pred_check_branch
        %87 = sbr.rel target = $region47
      $region46: #{reverse.11} parent=38 // pred_region
        %s89 = ssub.s32 256, 1
        loop: start=0, step=1, limit=1
        $region48: #{reverse.11} parent=46 // loop_pre_header
          _
        $region49: #{reverse.11} parent=46 // loop_header
          %s91 = sphi 0, %s95
          %p92 = scmp.ge.s32.totalorder %s91, 1
          %s96 = sphi [#allocation1], [#allocation1]
          %s97 = sphi %s1, %s1
        $region50: #{reverse.11} parent=46 // loop_header_branch
          %94 = sbr.rel (%p92) target = $region54
        $region51: #{reverse.11} parent=46 // loop_body
          %v98 = vld [vmem:[%s96] sm:%s89]
          %99 = vst [vmem:[%s97] sm:%s89] %v98
          %v100 = vld [vmem:[%s96 + $0x8] sm:%s89]
          %101 = vst [vmem:[%s97 + $0x8] sm:%s89] %v100
          %v102 = vld [vmem:[%s96 + $0x10] sm:%s89]
          %103 = vst [vmem:[%s97 + $0x10] sm:%s89] %v102
          %v104 = vld [vmem:[%s96 + $0x18] sm:%s89]
          %105 = vst [vmem:[%s97 + $0x18] sm:%s89] %v104
          %v106 = vld [vmem:[%s96 + $0x20] sm:%s89]
          %107 = vst [vmem:[%s97 + $0x20] sm:%s89] %v106
        $region52: #{reverse.11} parent=46 // loop_footer
          %s95 = sadd.s32 1, %s91
        $region53: #{reverse.11} parent=46 // loop_footer_branch
          %90 = sbr.rel target = $region49
        $region54: #{reverse.11} parent=46 // loop_exit
          _
      $region47: #{reverse.11} parent=38 // pred_fallthru
        _
    $region39: #{reverse.11} parent=1 // pred_fallthru
      _
    %130 = vnop

// kernel: tile.8
$region0: #{tile.8}
  #allocation0 [shape = 's32[1]{0}', space=sflag, size = 0x4, scoped, tag = 'scoped memory for tile.8']
  %s0 = inlined_call_operand.vmem [shape: f32[16], index: 0, kind: input, shape index: {}]
  %s1 = inlined_call_operand.vmem [shape: f32[5,16], index: 1, kind: output, shape index: {}]
  // Predicated region
  $region2: #{tile.8} parent=0 // pred_check
    _
  $region3: #{tile.8} parent=0 // pred_check_branch
    %3 = sbr.rel (0) target = $region5
  $region4: #{tile.8} parent=0 // pred_region
    _
  $region5: #{tile.8} parent=0 // pred_fallthru
    _
  %v4 = vld [vmem:[%s0] ss:$0 sm:$0xff]
  %5 = vst [vmem:[%s1] sm:$0xff] %v4

// kernel: fdlinear_forward.1
$region0: #{fdlinear_forward.1}
  #allocation0 [shape = 'u32[]', space=smem, size = 0x4, offset = 0x4, fixed_abs, tag = 'smem constant byte address 0x4 - core index']
  #allocation1 [shape = 'u32[144,128]{1,0:T(1,128)}', space=vmem, size = 0x12000, scoped, tag = 'internal scratch']
  %s0 = inlined_call_operand.vmem [shape: f32[2,384], index: 0, kind: input, shape index: {}]
  %s1 = inlined_call_operand.vmem [shape: f32[384,64], index: 1, kind: input, shape index: {}]
  %s2 = inlined_call_operand.vmem [shape: f32[1,64], index: 2, kind: input, shape index: {}]
  %s3 = inlined_call_operand.vmem [shape: f32[2,64], index: 3, kind: output, shape index: {}]
  %s4 = sld [smem:[#allocation0]]
  $region22: #{fdlinear_forward.1} parent=0
    _
  %s6 = ssub.s32 1, %s4
  %s7 = scalar_select 0, %s6, %s4
  // Predicated region
  $region2: #{fdlinear_forward.1} parent=0 // pred_check
    _
  $region3: #{fdlinear_forward.1} parent=0 // pred_check_branch
    %9 = sbr.rel (0) target = $region5
  $region4: #{fdlinear_forward.1} parent=0 // pred_region
    _
  $region5: #{fdlinear_forward.1} parent=0 // pred_fallthru
    _
  // Predicated region
  $region6: #{fdlinear_forward.1} parent=0 // pred_check
    _
  $region7: #{fdlinear_forward.1} parent=0 // pred_check_branch
    %11 = sbr.rel (0) target = $region9
  $region8: #{fdlinear_forward.1} parent=0 // pred_region
    _
  $region9: #{fdlinear_forward.1} parent=0 // pred_fallthru
    _
  // Predicated region
  $region10: #{fdlinear_forward.1} parent=0 // pred_check
    _
  $region11: #{fdlinear_forward.1} parent=0 // pred_check_branch
    %13 = sbr.rel (0) target = $region13
  $region12: #{fdlinear_forward.1} parent=0 // pred_region
    _
  $region13: #{fdlinear_forward.1} parent=0 // pred_fallthru
    _
  %v14 = vld [vmem:[%s0] sm:$0x3f]
  %v15 = vld [vmem:[%s1] sm:$0xff]
  %v16 = vld [vmem:[%s1 + $0x8] sm:$0xff]
  %v17 = vld [vmem:[%s1 + $0x10] sm:$0xff]
  %v18 = vld [vmem:[%s1 + $0x18] sm:$0xff]
  %v19 = vld [vmem:[%s1 + $0x20] sm:$0xff]
  %v20 = vld [vmem:[%s1 + $0x28] sm:$0xff]
  %v21 = vld [vmem:[%s1 + $0x30] sm:$0xff]
  %v22 = vld [vmem:[%s1 + $0x38] sm:$0xff]
  %v23 = vld [vmem:[%s1 + $0x40] sm:$0xff]
  %v24 = vld [vmem:[%s1 + $0x48] sm:$0xff]
  %v25 = vld [vmem:[%s1 + $0x50] sm:$0xff]
  %v26 = vld [vmem:[%s1 + $0x58] sm:$0xff]
  %v27 = vld [vmem:[%s1 + $0x60] sm:$0xff]
  %v28 = vld [vmem:[%s1 + $0x68] sm:$0xff]
  %v29 = vld [vmem:[%s1 + $0x70] sm:$0xff]
  %v30 = vld [vmem:[%s1 + $0x78] sm:$0xff]
  %v31 = vld [vmem:[%s1 + $0x80] sm:$0xff]
  %v32 = vld [vmem:[%s1 + $0x88] sm:$0xff]
  %v33 = vld [vmem:[%s1 + $0x90] sm:$0xff]
  %v34 = vld [vmem:[%s1 + $0x98] sm:$0xff]
  %v35 = vld [vmem:[%s1 + $0xa0] sm:$0xff]
  %v36 = vld [vmem:[%s1 + $0xa8] sm:$0xff]
  %v37 = vld [vmem:[%s1 + $0xb0] sm:$0xff]
  %v38 = vld [vmem:[%s1 + $0xb8] sm:$0xff]
  %v39 = vld [vmem:[%s1 + $0xc0] sm:$0xff]
  %v40 = vld [vmem:[%s1 + $0xc8] sm:$0xff]
  %v41 = vld [vmem:[%s1 + $0xd0] sm:$0xff]
  %v42 = vld [vmem:[%s1 + $0xd8] sm:$0xff]
  %v43 = vld [vmem:[%s1 + $0xe0] sm:$0xff]
  %v44 = vld [vmem:[%s1 + $0xe8] sm:$0xff]
  %v45 = vld [vmem:[%s1 + $0xf0] sm:$0xff]
  %v46 = vld [vmem:[%s1 + $0xf8] sm:$0xff]
  %v47 = vld [vmem:[%s1 + $0x100] sm:$0xff]
  %v48 = vld [vmem:[%s1 + $0x108] sm:$0xff]
  %v49 = vld [vmem:[%s1 + $0x110] sm:$0xff]
  %v50 = vld [vmem:[%s1 + $0x118] sm:$0xff]
  %v51 = vld [vmem:[%s1 + $0x120] sm:$0xff]
  %v52 = vld [vmem:[%s1 + $0x128] sm:$0xff]
  %v53 = vld [vmem:[%s1 + $0x130] sm:$0xff]
  %v54 = vld [vmem:[%s1 + $0x138] sm:$0xff]
  %v55 = vld [vmem:[%s1 + $0x140] sm:$0xff]
  %v56 = vld [vmem:[%s1 + $0x148] sm:$0xff]
  %v57 = vld [vmem:[%s1 + $0x150] sm:$0xff]
  %v58 = vld [vmem:[%s1 + $0x158] sm:$0xff]
  %v59 = vld [vmem:[%s1 + $0x160] sm:$0xff]
  %v60 = vld [vmem:[%s1 + $0x168] sm:$0xff]
  %v61 = vld [vmem:[%s1 + $0x170] sm:$0xff]
  %v62 = vld [vmem:[%s1 + $0x178] sm:$0xff]
  %v63 = vld [vmem:[%s2] sm:$0x1]
  %v65 = vlaneseq
  %v66 = vshrl.u32 %v65, 7
  %v67 = vsub.s32 0, %v66
  %v68 = vrot.slane %v63, %v67
  %v71 = vcombine.high %v14, %v14
  %v73 = vunpack.c.l.s4 1983009808
  %v74 = vunpack.c.0.s8 %v73
  %v75 = vlaneseq
  %v76 = vshrl.u32 %v75, 7
  %v77 = vsub.s32 %v74, %v76
  %v78 = vrot.slane %v14, %v77
  %v80 = vunpack.c.l.s4 1983009808
  %v81 = vunpack.c.0.s8 %v80
  %v82 = vlaneseq
  %v83 = vshrl.u32 %v82, 7
  %v84 = vsub.s32 %v81, %v83
  %v85 = vrot.slane %v71, %v84
  %v86 = vcombine.high %v78, %v78
  %90 = vmatprep.subr.mxu0 0.0
  %91 = vmatpush1.msra.mxu0 %v30
  %92 = vmatprep.subr.mxu0 0.0
  %93 = vmatpush1.msra.mxu0 %v29
  %94 = vmatprep.subr.mxu0 0.0
  %95 = vmatpush1.msra.mxu0 %v28
  %96 = vmatprep.subr.mxu0 0.0
  %97 = vmatpush1.msra.mxu0 %v27
  %98 = vmatprep.subr.mxu0 0.0
  %99 = vmatpush1.msra.mxu0 %v26
  %100 = vmatprep.subr.mxu0 0.0
  %101 = vmatpush1.msra.mxu0 %v25
  %102 = vmatprep.subr.mxu0 0.0
  %103 = vmatpush1.msra.mxu0 %v24
  %104 = vmatprep.subr.mxu0 0.0
  %105 = vmatpush1.msra.mxu0 %v23
  %106 = vmatprep.subr.mxu0 0.0
  %107 = vmatpush1.msra.mxu0 %v22
  %108 = vmatprep.subr.mxu0 0.0
  %109 = vmatpush1.msra.mxu0 %v21
  %110 = vmatprep.subr.mxu0 0.0
  %111 = vmatpush1.msra.mxu0 %v20
  %112 = vmatprep.subr.mxu0 0.0
  %113 = vmatpush1.msra.mxu0 %v19
  %114 = vmatprep.subr.mxu0 0.0
  %115 = vmatpush1.msra.mxu0 %v18
  %116 = vmatprep.subr.mxu0 0.0
  %117 = vmatpush1.msra.mxu0 %v17
  %118 = vmatprep.subr.mxu0 0.0
  %119 = vmatpush1.msra.mxu0 %v16
  %120 = vmatprep.subr.mxu0 0.0
  %121 = vmatpush1.msra.mxu0 %v15
  %122 = vmatprep.subr.mxu0 0.0
  %123 = vmatpush2.msra.mxu0 %v46
  %124 = vmatprep.subr.mxu0 0.0
  %125 = vmatpush2.msra.mxu0 %v45
  %126 = vmatprep.subr.mxu0 0.0
  %127 = vmatpush2.msra.mxu0 %v44
  %128 = vmatprep.subr.mxu0 0.0
  %129 = vmatpush2.msra.mxu0 %v43
  %130 = vmatprep.subr.mxu0 0.0
  %131 = vmatpush2.msra.mxu0 %v42
  %132 = vmatprep.subr.mxu0 0.0
  %133 = vmatpush2.msra.mxu0 %v41
  %134 = vmatprep.subr.mxu0 0.0
  %135 = vmatpush2.msra.mxu0 %v40
  %136 = vmatprep.subr.mxu0 0.0
  %137 = vmatpush2.msra.mxu0 %v39
  %138 = vmatprep.subr.mxu0 0.0
  %139 = vmatpush2.msra.mxu0 %v38
  %140 = vmatprep.subr.mxu0 0.0
  %141 = vmatpush2.msra.mxu0 %v37
  %142 = vmatprep.subr.mxu0 0.0
  %143 = vmatpush2.msra.mxu0 %v36
  %144 = vmatprep.subr.mxu0 0.0
  %145 = vmatpush2.msra.mxu0 %v35
  %146 = vmatprep.subr.mxu0 0.0
  %147 = vmatpush2.msra.mxu0 %v34
  %148 = vmatprep.subr.mxu0 0.0
  %149 = vmatpush2.msra.mxu0 %v33
  %150 = vmatprep.subr.mxu0 0.0
  %151 = vmatpush2.msra.mxu0 %v32
  %152 = vmatprep.subr.mxu0 0.0
  %153 = vmatpush2.msra.mxu0 %v31
  %154 = vmatprep.mubr.f32.mxu0 %v86
  %155 = vmatmul.mubr.f32.gmra.mxu0 %v78
  %v156 = vpop.f32.mrf.mxu0
  %v157 = vadd.f32 %v68, %v156
  %v158 = vpop.f32.mrf.mxu0
  %159 = vdwg.mxu0
  %160 = vmatprep.subr.mxu0 0.0
  %161 = vmatpush1.msra.mxu0 %v62
  %162 = vmatprep.subr.mxu0 0.0
  %163 = vmatpush1.msra.mxu0 %v61
  %164 = vmatprep.subr.mxu0 0.0
  %165 = vmatpush1.msra.mxu0 %v60
  %166 = vmatprep.subr.mxu0 0.0
  %167 = vmatpush1.msra.mxu0 %v59
  %168 = vmatprep.subr.mxu0 0.0
  %169 = vmatpush1.msra.mxu0 %v58
  %170 = vmatprep.subr.mxu0 0.0
  %171 = vmatpush1.msra.mxu0 %v57
  %172 = vmatprep.subr.mxu0 0.0
  %173 = vmatpush1.msra.mxu0 %v56
  %174 = vmatprep.subr.mxu0 0.0
  %175 = vmatpush1.msra.mxu0 %v55
  %176 = vmatprep.subr.mxu0 0.0
  %177 = vmatpush1.msra.mxu0 %v54
  %178 = vmatprep.subr.mxu0 0.0
  %179 = vmatpush1.msra.mxu0 %v53
  %180 = vmatprep.subr.mxu0 0.0
  %181 = vmatpush1.msra.mxu0 %v52
  %182 = vmatprep.subr.mxu0 0.0
  %183 = vmatpush1.msra.mxu0 %v51
  %184 = vmatprep.subr.mxu0 0.0
  %185 = vmatpush1.msra.mxu0 %v50
  %186 = vmatprep.subr.mxu0 0.0
  %187 = vmatpush1.msra.mxu0 %v49
  %188 = vmatprep.subr.mxu0 0.0
  %189 = vmatpush1.msra.mxu0 %v48
  %190 = vmatprep.subr.mxu0 0.0
  %191 = vmatpush1.msra.mxu0 %v47
  %192 = vmatprep.subr.mxu0 0.0
  %193 = vmatpush2.msra.mxu0 0.0
  %194 = vmatprep.subr.mxu0 0.0
  %195 = vmatpush2.msra.mxu0 0.0
  %196 = vmatprep.subr.mxu0 0.0
  %197 = vmatpush2.msra.mxu0 0.0
  %198 = vmatprep.subr.mxu0 0.0
  %199 = vmatpush2.msra.mxu0 0.0
  %200 = vmatprep.subr.mxu0 0.0
  %201 = vmatpush2.msra.mxu0 0.0
  %202 = vmatprep.subr.mxu0 0.0
  %203 = vmatpush2.msra.mxu0 0.0
  %204 = vmatprep.subr.mxu0 0.0
  %205 = vmatpush2.msra.mxu0 0.0
  %206 = vmatprep.subr.mxu0 0.0
  %207 = vmatpush2.msra.mxu0 0.0
  %208 = vmatprep.subr.mxu0 0.0
  %209 = vmatpush2.msra.mxu0 0.0
  %210 = vmatprep.subr.mxu0 0.0
  %211 = vmatpush2.msra.mxu0 0.0
  %212 = vmatprep.subr.mxu0 0.0
  %213 = vmatpush2.msra.mxu0 0.0
  %214 = vmatprep.subr.mxu0 0.0
  %215 = vmatpush2.msra.mxu0 0.0
  %216 = vmatprep.subr.mxu0 0.0
  %217 = vmatpush2.msra.mxu0 0.0
  %218 = vmatprep.subr.mxu0 0.0
  %219 = vmatpush2.msra.mxu0 0.0
  %220 = vmatprep.subr.mxu0 0.0
  %221 = vmatpush2.msra.mxu0 0.0
  %222 = vmatprep.subr.mxu0 0.0
  %223 = vmatpush2.msra.mxu0 0.0
  %224 = vmatprep.mubr.f32.mxu0 0.0
  %225 = vmatmul.mubr.f32.gmra.mxu0 %v85
  %v226 = vpop.f32.mrf.mxu0
  %v227 = vadd.f32 %v157, %v226
  %v228 = vpop.f32.mrf.mxu0
  %229 = vdwg.mxu0
  %vm230 = vcmask 517120
  %231 = vst.msk [vmem:[%s3] sm:$0x3] %vm230, %v227
  // Predicated region
  $region14: #{fdlinear_forward.1} parent=0 // pred_check
    _
  $region15: #{fdlinear_forward.1} parent=0 // pred_check_branch
    %233 = sbr.rel (0) target = $region17
  $region16: #{fdlinear_forward.1} parent=0 // pred_region
    _
  $region17: #{fdlinear_forward.1} parent=0 // pred_fallthru
    _
  // Predicated region
  $region18: #{fdlinear_forward.1} parent=0 // pred_check
    _
  $region19: #{fdlinear_forward.1} parent=0 // pred_check_branch
    %235 = sbr.rel (0) target = $region21
  $region20: #{fdlinear_forward.1} parent=0 // pred_region
    _
  $region21: #{fdlinear_forward.1} parent=0 // pred_fallthru
    _

</llo_original>
